<compile_context>
chip_gen: v5e
topology: v5e:2x2
jax: 0.10.0
libtpu: 0.0.40
codegen_flags: <defaults>
</compile_context>

<pallas_src>
import functools

import jax
import jax.numpy as jnp
from jax.experimental import pallas as pl
from jax.experimental.pallas import tpu as pltpu


def _round_up(a: int, b: int) -> int:
    return ((a + b - 1) // b) * b


def _tpu_hw():
    """(vmem_capacity_bytes, device_kind lowercase), with safe fallbacks."""
    kind = ""
    try:
        kind = jax.devices()[0].device_kind.lower()
    except Exception:
        pass
    if "v5" in kind or "v6" in kind:
        vmem = 128 << 20          # v5e / v6e: 128 MiB VMEM
    else:
        vmem = 64 << 20           # conservative default (v7x: 64 MiB per TC)
    try:
        info = pltpu.get_tpu_info()
        vmem = int(getattr(info, "vmem_capacity_bytes", vmem))
    except Exception:
        pass
    return vmem, kind


def _vmem_budget(vmem_cap: int, kind: str) -> int:
    budget = (3 * vmem_cap) // 4          # leave ~25% headroom for the compiler
    if "v7" in kind:
        budget = min(budget, 48 << 20)    # v7x: 64 MiB/TC physical
    return budget


# --------------------------------------------------------------------------
# Kernels
# --------------------------------------------------------------------------
def _ffn_kernel_resident(x_ref, w1_ref, b1_ref, w2_ref, b2_ref, o_ref):
    """Whole W1/W2 resident in VMEM; grid = (M tiles,).

    Constant weight block indices => weights DMA'd from HBM once for the
    entire grid, not once per M tile.
    """
    # linear1 + ReLU in the input dtype (bf16 hidden stays bf16; MXU still
    # accumulates in f32 internally).
    h = jnp.dot(x_ref[...], w1_ref[...], preferred_element_type=x_ref.dtype)
    h = jnp.maximum(h + b1_ref[...], 0.0)
    # dropout: identity at inference.
    # TODO(synk): training-mode dropout would need pltpu.prng_seed/prng_random_bits.
    y = jnp.dot(h.astype(w2_ref.dtype), w2_ref[...],
                preferred_element_type=jnp.float32)
    o_ref[...] = (y + b2_ref[...].astype(jnp.float32)).astype(o_ref.dtype)


def _ffn_kernel_tiled(x_ref, w1_ref, b1_ref, w2_ref, b2_ref, o_ref, acc_ref):
    """Grid = (M tiles, FF tiles); dim_feedforward is the reduction axis.

        h_f  = relu(x_i @ W1[:, f-slab] + b1[f-slab])
        acc += h_f @ W2[f-slab, :]          (f32 accumulator)
        o_i  = (acc + b2).astype(out)       on the last ff step
    """
    f = pl.program_id(1)

    @pl.when(f == 0)
    def _():
        acc_ref[...] = jnp.zeros_like(acc_ref)

    h = jnp.dot(x_ref[...], w1_ref[...], preferred_element_type=x_ref.dtype)
    h = jnp.maximum(h + b1_ref[...], 0.0)
    acc_ref[...] += jnp.dot(h.astype(w2_ref.dtype), w2_ref[...],
                            preferred_element_type=jnp.float32)

    @pl.when(f == pl.num_programs(1) - 1)
    def _():
        o_ref[...] = (acc_ref[...] + b2_ref[...].astype(jnp.float32)
                      ).astype(o_ref.dtype)


# --------------------------------------------------------------------------
# Wrapper
# --------------------------------------------------------------------------
@functools.partial(jax.jit, static_argnames=("tile_m", "tile_ff", "force_tiled"))
def feed_forward(x, w1, b1, w2, b2, *, tile_m=None, tile_ff=2048,
                 force_tiled=False):
    """x: (seq, batch, d_model). Returns same shape/dtype as x.

    w1: (d_model, dim_ff)   b1: (dim_ff,)
    w2: (dim_ff, d_model)   b2: (d_model,)
    """
    seq, batch, d_model = x.shape
    dim_ff = w1.shape[1]
    m = seq * batch

    vmem_cap, kind = _tpu_hw()
    budget = _vmem_budget(vmem_cap, kind)
    two_tc = "v7" in kind

    x_itm = jnp.dtype(x.dtype).itemsize
    w_itm = jnp.dtype(w1.dtype).itemsize
    h_itm = x_itm                       # hidden kept in the input dtype

    # ---- M tiling: big tiles, even split (no pathological row padding) ----
    if tile_m is None:
        tile_m = 512 if "v5" in kind else 1024
    m8 = _round_up(m, 8)
    n_m = max(1, pl.cdiv(m8, tile_m))
    if two_tc and n_m == 1 and m8 >= 512:
        n_m = 2                          # 2 TensorCores: keep >=2 parallel M tiles
    tm = _round_up(pl.cdiv(m8, n_m), 8)

    # ---- lane-align feature dims ------------------------------------------
    dm_pad = _round_up(d_model, 128)
    ff128 = _round_up(dim_ff, 128)

    def _resident_vmem(tm_):
        return (2 * 2 * dm_pad * ff128 * w_itm      # W1+W2 (pipeline dbl-buffers)
                + 2 * tm_ * dm_pad * x_itm          # x tiles
                + 2 * tm_ * dm_pad * x_itm          # out tiles
                + tm_ * ff128 * h_itm               # hidden activation
                + 2 * (ff128 + dm_pad) * w_itm      # biases
                + (2 << 20))                        # slack

    def _tiled_vmem(tm_, tf_):
        return (2 * 2 * dm_pad * tf_ * w_itm        # W1/W2 slabs, dbl-buffered
                + 2 * tm_ * dm_pad * x_itm
                + 2 * tm_ * dm_pad * x_itm
                + tm_ * dm_pad * 4                  # f32 accumulator
                + tm_ * tf_ * h_itm                 # hidden activation
                + 2 * (tf_ + dm_pad) * w_itm
                + (2 << 20))

    use_resident = (not force_tiled) and _resident_vmem(tm) <= budget

    if use_resident:
        tf = ff_pad = ff128
    else:
        tf = min(_round_up(tile_ff, 128), ff128)
        while _tiled_vmem(tm, tf) > budget and tf > 256:
            tf = max(256, ((tf // 2) // 128) * 128)
        while _tiled_vmem(tm, tf) > budget and tm > 256:
            tm = max(256, _round_up(tm // 2, 8))
        ff_pad = _round_up(dim_ff, tf)

    m_pad = _round_up(m, tm)
    n_m_tiles = m_pad // tm

    # ---- zero-pad operands (exact: relu(0)=0 contributes 0; extra rows and
    # d_model columns are sliced off at the end) ----------------------------
    pad_m, pad_dm, pad_ff = m_pad - m, dm_pad - d_model, ff_pad - dim_ff
    x2d = x.reshape(m, d_model)
    if pad_m or pad_dm:
        x2d = jnp.pad(x2d, ((0, pad_m), (0, pad_dm)))
    if pad_dm or pad_ff:
        w1 = jnp.pad(w1, ((0, pad_dm), (0, pad_ff)))
        w2 = jnp.pad(w2, ((0, pad_ff), (0, pad_dm)))
    if pad_ff:
        b1 = jnp.pad(b1, ((0, pad_ff),))
    if pad_dm:
        b2 = jnp.pad(b2, ((0, pad_dm),))
    b1_2d = b1.reshape(1, ff_pad)
    b2_2d = b2.reshape(1, dm_pad)

    # ---- VMEM budget & cost hint ------------------------------------------
    vmem_est = _resident_vmem(tm) if use_resident else _tiled_vmem(tm, tf)
    vmem_limit = int(min(max(vmem_est, 32 << 20), budget))

    weight_bytes = (2 * dm_pad * ff_pad + ff_pad + dm_pad) * w_itm
    weight_streams = 1 if use_resident else n_m_tiles   # re-streamed per M tile
    cost = pl.CostEstimate(
        flops=4 * m_pad * dm_pad * ff_pad,
        transcendentals=0,
        bytes_accessed=int(2 * m_pad * dm_pad * x_itm
                           + weight_streams * weight_bytes),
    )

    # ---- grid / specs per variant -----------------------------------------
    if use_resident:
        grid_spec = pltpu.PrefetchScalarGridSpec(
            num_scalar_prefetch=0,
            grid=(n_m_tiles,),
            in_specs=[
                pl.BlockSpec((tm, dm_pad), lambda i: (i, 0)),        # x tile
                pl.BlockSpec((dm_pad, ff_pad), lambda i: (0, 0)),    # W1 resident
                pl.BlockSpec((1, ff_pad), lambda i: (0, 0)),         # b1 resident
                pl.BlockSpec((ff_pad, dm_pad), lambda i: (0, 0)),    # W2 resident
                pl.BlockSpec((1, dm_pad), lambda i: (0, 0)),         # b2 resident
            ],
            out_specs=pl.BlockSpec((tm, dm_pad), lambda i: (i, 0)),
        )
        kernel = _ffn_kernel_resident
        dims = ("parallel",)
    else:
        grid_spec = pltpu.PrefetchScalarGridSpec(
            num_scalar_prefetch=0,
            grid=(n_m_tiles, ff_pad // tf),
            in_specs=[
                pl.BlockSpec((tm, dm_pad), lambda i, f: (i, 0)),     # x tile
                pl.BlockSpec((dm_pad, tf), lambda i, f: (0, f)),     # W1 slab
                pl.BlockSpec((1, tf), lambda i, f: (0, f)),          # b1 slab
                pl.BlockSpec((tf, dm_pad), lambda i, f: (f, 0)),     # W2 slab
                pl.BlockSpec((1, dm_pad), lambda i, f: (0, 0)),      # b2
            ],
            out_specs=pl.BlockSpec((tm, dm_pad), lambda i, f: (i, 0)),
            scratch_shapes=[pltpu.VMEM((tm, dm_pad), jnp.float32)],
        )
        kernel = _ffn_kernel_tiled
        dims = ("parallel", "arbitrary")

    out2d = pl.pallas_call(
        kernel,
        out_shape=jax.ShapeDtypeStruct((m_pad, dm_pad), x.dtype),
        grid_spec=grid_spec,
        compiler_params=pltpu.CompilerParams(
            dimension_semantics=dims,
            vmem_limit_bytes=vmem_limit,
        ),
        cost_estimate=cost,
    )(x2d, w1, b1_2d, w2, b2_2d)

    return out2d[:m, :d_model].reshape(seq, batch, d_model)


# --------------------------------------------------------------------------
# Reference / init helpers
# --------------------------------------------------------------------------
def _init_linear_params(key, in_features, out_features, dtype=jnp.float32):
    """nn.Linear-style init: U(-1/sqrt(fan_in), 1/sqrt(fan_in)).
    Weight returned pre-transposed to (in_features, out_features)."""
    kw, kb = jax.random.split(key)
    bound = 1.0 / float(in_features) ** 0.5
    w = jax.random.uniform(kw, (in_features, out_features), jnp.float32,
                           minval=-bound, maxval=bound).astype(dtype)
    b = jax.random.uniform(kb, (out_features,), jnp.float32,
                           minval=-bound, maxval=bound).astype(dtype)
    return w, b


def _ref_ffn(x, w1, b1, w2, b2):
    xf, w1f, b1f = x.astype(jnp.float32), w1.astype(jnp.float32), b1.astype(jnp.float32)
    w2f, b2f = w2.astype(jnp.float32), b2.astype(jnp.float32)
    return jnp.maximum(xf @ w1f + b1f, 0.0) @ w2f + b2f


if __name__ == "__main__":
    key = jax.random.PRNGKey(0)

    # ---- test 1: f32, tiny shapes (d_model padding + resident weights) ----
    seq, batch, d_model, dim_ff = 8, 2, 32, 128
    kx, k1, k2, key = jax.random.split(key, 4)
    x = jax.random.normal(kx, (seq, batch, d_model), jnp.float32)
    w1, b1 = _init_linear_params(k1, d_model, dim_ff)
    w2, b2 = _init_linear_params(k2, dim_ff, d_model)

    y = jax.block_until_ready(feed_forward(x, w1, b1, w2, b2))
    ref = _ref_ffn(x, w1, b1, w2, b2)
    assert y.shape == x.shape and y.dtype == x.dtype
    assert jnp.allclose(y, ref, atol=1e-5, rtol=1e-5), "f32 mismatch vs reference"

    # ---- test 2: bf16, odd M, forced ff-tiled reduction path --------------
    seq, batch, d_model, dim_ff = 9, 3, 128, 384
    kx, k1, k2, key = jax.random.split(key, 4)
    xb = jax.random.normal(kx, (seq, batch, d_model), jnp.float32).astype(jnp.bfloat16)
    w1b, b1b = _init_linear_params(k1, d_model, dim_ff, jnp.bfloat16)
    w2b, b2b = _init_linear_params(k2, dim_ff, d_model, jnp.bfloat16)

    yb = jax.block_until_ready(
        feed_forward(xb, w1b, b1b, w2b, b2b, tile_ff=128, force_tiled=True))
    refb = _ref_ffn(xb, w1b, b1b, w2b, b2b)
    assert yb.shape == xb.shape and yb.dtype == xb.dtype
    # bf16 hidden activation is a deliberate precision tradeoff vs f32 ref.
    assert jnp.allclose(yb.astype(jnp.float32), refb, atol=1e-1, rtol=1e-1), \
        "bf16 (tiled) mismatch vs reference"

    # ---- test 3: bf16, non-128 d_model, multi-tile M, auto (resident) path -
    seq, batch, d_model, dim_ff = 65, 8, 192, 512
    kx, k1, k2, key = jax.random.split(key, 4)
    xc = jax.random.normal(kx, (seq, batch, d_model), jnp.float32).astype(jnp.bfloat16)
    w1c, b1c = _init_linear_params(k1, d_model, dim_ff, jnp.bfloat16)
    w2c, b2c = _init_linear_params(k2, dim_ff, d_model, jnp.bfloat16)

    yc = jax.block_until_ready(feed_forward(xc, w1c, b1c, w2c, b2c))
    refc = _ref_ffn(xc, w1c, b1c, w2c, b2c)
    assert yc.shape == xc.shape and yc.dtype == xc.dtype
    assert jnp.allclose(yc.astype(jnp.float32), refc, atol=1e-1, rtol=1e-1), \
        "bf16 (resident) mismatch vs reference"

    print("KERNEL_OK")
</pallas_src>

<mosaic_0001>
module attributes {stable_mosaic.version = 11 : i64} {
  func.func @_ffn_kernel_resident(%arg0: i32, %arg1: memref<16x128xf32, #tpu.memory_space<vmem>>, %arg2: memref<128x128xf32, #tpu.memory_space<vmem>>, %arg3: memref<1x128xf32, #tpu.memory_space<vmem>>, %arg4: memref<128x128xf32, #tpu.memory_space<vmem>>, %arg5: memref<1x128xf32, #tpu.memory_space<vmem>>, %arg6: memref<16x128xf32, #tpu.memory_space<vmem>>) attributes {dimension_semantics = [#tpu.dimension_semantics<parallel>], iteration_bounds = array<i64: 1>, scalar_prefetch = 0 : i64, scratch_operands = 0 : i64, tpu.core_type = #tpu.core_type<tc>, window_params = [{transform_indices = @transform_0, window_bounds = array<i64: 16, 128>}, {pipeline_mode = #tpu.pipeline_mode<synchronous>, transform_indices = @transform_1, window_bounds = array<i64: 128, 128>}, {pipeline_mode = #tpu.pipeline_mode<synchronous>, transform_indices = @transform_2, window_bounds = array<i64: 1, 128>}, {pipeline_mode = #tpu.pipeline_mode<synchronous>, transform_indices = @transform_3, window_bounds = array<i64: 128, 128>}, {pipeline_mode = #tpu.pipeline_mode<synchronous>, transform_indices = @transform_4, window_bounds = array<i64: 1, 128>}, {transform_indices = @transform_5, window_bounds = array<i64: 16, 128>}]} {
    %c0 = arith.constant 0 : index
    %c0_0 = arith.constant 0 : index
    %0 = vector.load %arg1[%c0, %c0_0] : memref<16x128xf32, #tpu.memory_space<vmem>>, vector<16x128xf32>
    %c0_1 = arith.constant 0 : index
    %c0_2 = arith.constant 0 : index
    %1 = vector.load %arg2[%c0_1, %c0_2] : memref<128x128xf32, #tpu.memory_space<vmem>>, vector<128x128xf32>
    %cst = arith.constant dense<0.000000e+00> : vector<16x128xf32>
    %2 = tpu.matmul %0, %1, %cst {dimension_numbers = #tpu.dot_dimension_numbers<[1], [0], [0], [1], [0, 0, 1, 1], [], []>} : vector<16x128xf32>, vector<128x128xf32>, vector<16x128xf32> -> vector<16x128xf32>
    %c0_3 = arith.constant 0 : index
    %c0_4 = arith.constant 0 : index
    %3 = vector.load %arg3[%c0_3, %c0_4] : memref<1x128xf32, #tpu.memory_space<vmem>>, vector<1x128xf32>
    %4 = vector.broadcast %3 : vector<1x128xf32> to vector<16x128xf32>
    %5 = arith.addf %2, %4 : vector<16x128xf32>
    %cst_5 = arith.constant 0.000000e+00 : f32
    %6 = vector.broadcast %cst_5 : f32 to vector<16x128xf32>
    %7 = arith.maximumf %5, %6 : vector<16x128xf32>
    %c0_6 = arith.constant 0 : index
    %c0_7 = arith.constant 0 : index
    %8 = vector.load %arg4[%c0_6, %c0_7] : memref<128x128xf32, #tpu.memory_space<vmem>>, vector<128x128xf32>
    %cst_8 = arith.constant dense<0.000000e+00> : vector<16x128xf32>
    %9 = tpu.matmul %7, %8, %cst_8 {dimension_numbers = #tpu.dot_dimension_numbers<[1], [0], [0], [1], [0, 0, 1, 1], [], []>} : vector<16x128xf32>, vector<128x128xf32>, vector<16x128xf32> -> vector<16x128xf32>
    %c0_9 = arith.constant 0 : index
    %c0_10 = arith.constant 0 : index
    %10 = vector.load %arg5[%c0_9, %c0_10] : memref<1x128xf32, #tpu.memory_space<vmem>>, vector<1x128xf32>
    %11 = vector.broadcast %10 : vector<1x128xf32> to vector<16x128xf32>
    %12 = arith.addf %9, %11 : vector<16x128xf32>
    %c0_11 = arith.constant 0 : index
    %c0_12 = arith.constant 0 : index
    %13 = vector.load %arg6[%c0_11, %c0_12] : memref<16x128xf32, #tpu.memory_space<vmem>>, vector<16x128xf32>
    tpu.vector_store %arg6[%c0_11, %c0_12], %12 {strides = array<i32>} : memref<16x128xf32, #tpu.memory_space<vmem>>, vector<16x128xf32>,
    return
  }
  func.func @transform_0(%arg0: i32) -> (i32, i32) {
    %c0_i32 = arith.constant 0 : i32
    %c0_i32_0 = arith.constant 0 : i32
    return %arg0, %c0_i32 : i32, i32
  }
  func.func @transform_1(%arg0: i32) -> (i32, i32) {
    %c0_i32 = arith.constant 0 : i32
    %c0_i32_0 = arith.constant 0 : i32
    %c0_i32_1 = arith.constant 0 : i32
    return %c0_i32, %c0_i32_0 : i32, i32
  }
  func.func @transform_2(%arg0: i32) -> (i32, i32) {
    %c0_i32 = arith.constant 0 : i32
    %c0_i32_0 = arith.constant 0 : i32
    %c0_i32_1 = arith.constant 0 : i32
    return %c0_i32, %c0_i32_0 : i32, i32
  }
  func.func @transform_3(%arg0: i32) -> (i32, i32) {
    %c0_i32 = arith.constant 0 : i32
    %c0_i32_0 = arith.constant 0 : i32
    %c0_i32_1 = arith.constant 0 : i32
    return %c0_i32, %c0_i32_0 : i32, i32
  }
  func.func @transform_4(%arg0: i32) -> (i32, i32) {
    %c0_i32 = arith.constant 0 : i32
    %c0_i32_0 = arith.constant 0 : i32
    %c0_i32_1 = arith.constant 0 : i32
    return %c0_i32, %c0_i32_0 : i32, i32
  }
  func.func @transform_5(%arg0: i32) -> (i32, i32) {
    %c0_i32 = arith.constant 0 : i32
    %c0_i32_0 = arith.constant 0 : i32
    return %arg0, %c0_i32 : i32, i32
  }
}

</mosaic_0001>

<llo_original>
// kernel: feed_forward.1
$region0: #{feed_forward.1}
  #allocation0 [shape = 'u32[]', space=smem, size = 0x4, offset = 0x4, fixed_abs, tag = 'smem constant byte address 0x4 - core index']
  #allocation1 [shape = 'u32[72,128]{1,0:T(1,128)}', space=vmem, size = 0x9000, scoped, tag = 'internal scratch']
  %s0 = inlined_call_operand.vmem [shape: f32[16,128], index: 0, kind: input, shape index: {}]
  %s1 = inlined_call_operand.vmem [shape: f32[128,128], index: 1, kind: input, shape index: {}]
  %s2 = inlined_call_operand.vmem [shape: f32[1,128], index: 2, kind: input, shape index: {}]
  %s3 = inlined_call_operand.vmem [shape: f32[128,128], index: 3, kind: input, shape index: {}]
  %s4 = inlined_call_operand.vmem [shape: f32[1,128], index: 4, kind: input, shape index: {}]
  %s5 = inlined_call_operand.hbm [shape: f32[16,128], index: 5, kind: output, shape index: {}]
  %s6 = sld [smem:[#allocation0]]
  $region30: #{feed_forward.1} parent=0
    _
  %s8 = ssub.s32 1, %s6
  %s9 = scalar_select 0, %s8, %s6
  $region1: #{feed_forward.1} parent=0
    #allocation2 [shape = 'u8[8192]{0}', space=vmem, size = 0x2000, scoped, tag = 'output window, operand 0, single buffered']
    #allocation3 [shape = 's32[1]{0}', space=sflag, size = 0x4, scoped, tag = 'scoped memory for feed_forward.1']
    %10 = vsyncpa [#allocation3], 0
    // Predicated region
    $region2: #{feed_forward.1} parent=1 // pred_check
      _
    $region3: #{feed_forward.1} parent=1 // pred_check_branch
      %12 = sbr.rel (0) target = $region5
    $region4: #{feed_forward.1} parent=1 // pred_region
      _
    $region5: #{feed_forward.1} parent=1 // pred_fallthru
      _
    // Predicated region
    $region6: #{feed_forward.1} parent=1 // pred_check
      _
    $region7: #{feed_forward.1} parent=1 // pred_check_branch
      %14 = sbr.rel (0) target = $region9
    $region8: #{feed_forward.1} parent=1 // pred_region
      _
    $region9: #{feed_forward.1} parent=1 // pred_fallthru
      _
    // Predicated region
    $region10: #{feed_forward.1} parent=1 // pred_check
      _
    $region11: #{feed_forward.1} parent=1 // pred_check_branch
      %16 = sbr.rel (0) target = $region13
    $region12: #{feed_forward.1} parent=1 // pred_region
      _
    $region13: #{feed_forward.1} parent=1 // pred_fallthru
      _
    // Predicated region
    $region14: #{feed_forward.1} parent=1 // pred_check
      _
    $region15: #{feed_forward.1} parent=1 // pred_check_branch
      %18 = sbr.rel (0) target = $region17
    $region16: #{feed_forward.1} parent=1 // pred_region
      _
    $region17: #{feed_forward.1} parent=1 // pred_fallthru
      _
    // Predicated region
    $region18: #{feed_forward.1} parent=1 // pred_check
      _
    $region19: #{feed_forward.1} parent=1 // pred_check_branch
      %20 = sbr.rel (0) target = $region21
    $region20: #{feed_forward.1} parent=1 // pred_region
      _
    $region21: #{feed_forward.1} parent=1 // pred_fallthru
      _
    %v21 = vld [vmem:[%s0] sm:$0xff]
    %v22 = vld [vmem:[%s0 + $0x8] sm:$0xff]
    %v23 = vld [vmem:[%s1] sm:$0xff]
    %v24 = vld [vmem:[%s1 + $0x8] sm:$0xff]
    %v25 = vld [vmem:[%s1 + $0x10] sm:$0xff]
    %v26 = vld [vmem:[%s1 + $0x18] sm:$0xff]
    %v27 = vld [vmem:[%s1 + $0x20] sm:$0xff]
    %v28 = vld [vmem:[%s1 + $0x28] sm:$0xff]
    %v29 = vld [vmem:[%s1 + $0x30] sm:$0xff]
    %v30 = vld [vmem:[%s1 + $0x38] sm:$0xff]
    %v31 = vld [vmem:[%s1 + $0x40] sm:$0xff]
    %v32 = vld [vmem:[%s1 + $0x48] sm:$0xff]
    %v33 = vld [vmem:[%s1 + $0x50] sm:$0xff]
    %v34 = vld [vmem:[%s1 + $0x58] sm:$0xff]
    %v35 = vld [vmem:[%s1 + $0x60] sm:$0xff]
    %v36 = vld [vmem:[%s1 + $0x68] sm:$0xff]
    %v37 = vld [vmem:[%s1 + $0x70] sm:$0xff]
    %v38 = vld [vmem:[%s1 + $0x78] sm:$0xff]
    %v39 = vld [vmem:[%s2] sm:$0x1]
    %v41 = vperm.slane %v39, 0
    %43 = vmatpush.msra.mxu0 %v38
    %44 = vmatpush.msra.mxu0 %v37
    %45 = vmatpush.msra.mxu0 %v36
    %46 = vmatpush.msra.mxu0 %v35
    %47 = vmatpush.msra.mxu0 %v34
    %48 = vmatpush.msra.mxu0 %v33
    %49 = vmatpush.msra.mxu0 %v32
    %50 = vmatpush.msra.mxu0 %v31
    %51 = vmatpush.msra.mxu0 %v30
    %52 = vmatpush.msra.mxu0 %v29
    %53 = vmatpush.msra.mxu0 %v28
    %54 = vmatpush.msra.mxu0 %v27
    %55 = vmatpush.msra.mxu0 %v26
    %56 = vmatpush.msra.mxu0 %v25
    %57 = vmatpush.msra.mxu0 %v24
    %58 = vmatpush.msra.mxu0 %v23
    %59 = vmatmul.f32.gmra.mxu0 %v21
    %v60 = vpop.f32.mrf.mxu0
    %v61 = vadd.f32 %v41, %v60
    %62 = vmatmul.f32.gmra.mxu0 %v22
    %v63 = vpop.f32.mrf.mxu0
    %v64 = vadd.f32 %v41, %v63
    %65 = vdwg.mxu0
    %v66 = vmax.f32 %v61, 0.0
    %v67 = vmax.f32 %v64, 0.0
    %v68 = vld [vmem:[%s3] sm:$0xff]
    %v69 = vld [vmem:[%s3 + $0x8] sm:$0xff]
    %v70 = vld [vmem:[%s3 + $0x10] sm:$0xff]
    %v71 = vld [vmem:[%s3 + $0x18] sm:$0xff]
    %v72 = vld [vmem:[%s3 + $0x20] sm:$0xff]
    %v73 = vld [vmem:[%s3 + $0x28] sm:$0xff]
    %v74 = vld [vmem:[%s3 + $0x30] sm:$0xff]
    %v75 = vld [vmem:[%s3 + $0x38] sm:$0xff]
    %v76 = vld [vmem:[%s3 + $0x40] sm:$0xff]
    %v77 = vld [vmem:[%s3 + $0x48] sm:$0xff]
    %v78 = vld [vmem:[%s3 + $0x50] sm:$0xff]
    %v79 = vld [vmem:[%s3 + $0x58] sm:$0xff]
    %v80 = vld [vmem:[%s3 + $0x60] sm:$0xff]
    %v81 = vld [vmem:[%s3 + $0x68] sm:$0xff]
    %v82 = vld [vmem:[%s3 + $0x70] sm:$0xff]
    %v83 = vld [vmem:[%s3 + $0x78] sm:$0xff]
    %v84 = vld [vmem:[%s4] sm:$0x1]
    %v86 = vperm.slane %v84, 0
    %88 = vmatpush.msra.mxu0 %v83
    %89 = vmatpush.msra.mxu0 %v82
    %90 = vmatpush.msra.mxu0 %v81
    %91 = vmatpush.msra.mxu0 %v80
    %92 = vmatpush.msra.mxu0 %v79
    %93 = vmatpush.msra.mxu0 %v78
    %94 = vmatpush.msra.mxu0 %v77
    %95 = vmatpush.msra.mxu0 %v76
    %96 = vmatpush.msra.mxu0 %v75
    %97 = vmatpush.msra.mxu0 %v74
    %98 = vmatpush.msra.mxu0 %v73
    %99 = vmatpush.msra.mxu0 %v72
    %100 = vmatpush.msra.mxu0 %v71
    %101 = vmatpush.msra.mxu0 %v70
    %102 = vmatpush.msra.mxu0 %v69
    %103 = vmatpush.msra.mxu0 %v68
    %104 = vmatmul.f32.gmra.mxu0 %v66
    %v105 = vpop.f32.mrf.mxu0
    %v106 = vadd.f32 %v86, %v105
    %107 = vmatmul.f32.gmra.mxu0 %v67
    %v108 = vpop.f32.mrf.mxu0
    %v109 = vadd.f32 %v86, %v108
    %110 = vdwg.mxu0
    %111 = vst [vmem:[#allocation2] sm:$0xff] %v106
    %112 = vst [vmem:[#allocation2 + $0x8] sm:$0xff] %v109
    // Predicated region
    $region22: #{feed_forward.1} parent=1 // pred_check
      _
    $region23: #{feed_forward.1} parent=1 // pred_check_branch
      %114 = sbr.rel (0) target = $region25
    $region24: #{feed_forward.1} parent=1 // pred_region
      %116 = vsyncadd [#allocation3], 0
      %s117 = sshll.u32 [#allocation2], 4
      %s118 = int_to_ptr.vmem [resolvable:$true] %s117
      %s119 = sshll.u32 %s5, 4
      %s120 = int_to_ptr.hbm [resolvable:$true] %s119
      %125 = dma.vmem_to_hbm [thread:$0]  %s118, 256, %s120, [#allocation3], 128, 128, 8
    $region25: #{feed_forward.1} parent=1 // pred_fallthru
      _
    // Predicated region
    $region26: #{feed_forward.1} parent=1 // pred_check
      _
    $region27: #{feed_forward.1} parent=1 // pred_check_branch
      %127 = sbr.rel (0) target = $region29
    $region28: #{feed_forward.1} parent=1 // pred_region
      %129 = dma.done [#allocation3], 256
    $region29: #{feed_forward.1} parent=1 // pred_fallthru
      _
    %130 = vsyncpa [#allocation3], 1

</llo_original>
